<compile_context>
chip_gen: v7x
topology: tpu7x:2x2x1
jax: 0.10.0
libtpu: 0.0.40
codegen_flags: <defaults>
</compile_context>

<pallas_src>
import functools

import jax
import jax.numpy as jnp
from jax.experimental import pallas as pl
from jax.experimental.pallas import tpu as pltpu


def _round_up(x, m):
    return -(-x // m) * m


# -----------------------------------------------------------------------------
# Kernel (single invocation: preamble -> serial GRU recurrence -> batched epilogue)
# -----------------------------------------------------------------------------
def decoder_kernel(ids_ref,                 # SMEM (T,) int32   scalar prefetch
                   emb_tab_ref,             # (O, 1, Hp) f32    embedding table
                   enc_ref,                 # (Sp, Hp)   f32    encoder outputs (S-major)
                   w_ih_ref,                # (Hp, 3*Hp)        W_ih.T padded (r,z,n lane blocks)
                   w_hh_ref,                # (Hp, 3*Hp)        W_hh.T padded
                   b_ih_ref,                # (1, 3*Hp)  f32
                   b_hh_ref,                # (1, 3*Hp)  f32
                   h0_ref,                  # (1, Hp)    f32    initial hidden
                   w_out_ref,               # (Hp, Op)          out.weight.T padded
                   b_out_ref,               # (1, Op)    f32    out.bias (-1e30 in pad lanes)
                   logp_ref,                # out (Tp, Op) f32  log-probs (rows >= T are junk)
                   hfin_ref,                # out (1, Hp)  f32  final hidden
                   x_scr,                   # VMEM (Tp, Hp)   f32
                   gi_scr,                  # VMEM (Tp, 3*Hp) f32
                   h_scr,                   # VMEM (Tp, Hp)   f32
                   *, T):
    Hp = h0_ref.shape[-1]

    # Zero the scratch pad rows so the batched epilogue stays finite.
    x_scr[...] = jnp.zeros_like(x_scr)
    h_scr[...] = jnp.zeros_like(h_scr)

    # ---- loop-invariant "attention" (hoisted out of the recurrence) ----------
    # F.softmax(bmm(emb, enc), dim=1) in the source model is a softmax over a
    # singleton axis of the (1,1,S) score tensor, so the attention weights are
    # identically 1.0 and att_tensor is just the sum over the S positions of
    # the (row-major reshaped) encoder output.  Identical every step.
    att = jnp.sum(enc_ref[...], axis=0, keepdims=True)                    # (1, Hp)

    # ---- preamble: gather all T embedding rows, batch the input projection ---
    for t in range(T):                                                    # static, tiny
        row = emb_tab_ref[ids_ref[t]].astype(jnp.float32)                 # (1, Hp)
        x_scr[pl.ds(t, 1), :] = row + att

    gi_scr[...] = jnp.dot(x_scr[...].astype(w_ih_ref.dtype), w_ih_ref[...],
                          preferred_element_type=jnp.float32) + b_ih_ref[...]

    # ---- serial recurrence: only h @ W_hh.T stays inside the loop ------------
    def step(t, h_prev):
        gh = jnp.dot(h_prev.astype(w_hh_ref.dtype), w_hh_ref[...],
                     preferred_element_type=jnp.float32) + b_hh_ref[...]  # (1, 3*Hp)
        gi = gi_scr[pl.ds(t, 1), :]                                       # (1, 3*Hp)
        r = jax.nn.sigmoid(gi[:, 0:Hp] + gh[:, 0:Hp])
        z = jax.nn.sigmoid(gi[:, Hp:2 * Hp] + gh[:, Hp:2 * Hp])
        n = jnp.tanh(gi[:, 2 * Hp:3 * Hp] + r * gh[:, 2 * Hp:3 * Hp])
        h_new = (1.0 - z) * n + z * h_prev                                # pad lanes stay 0
        h_scr[pl.ds(t, 1), :] = h_new
        return h_new

    h_final = jax.lax.fori_loop(0, T, step, h0_ref[...], unroll=True)
    hfin_ref[...] = h_final

    # ---- batched epilogue: output projection + log_softmax over all T rows ---
    logits = jnp.dot(h_scr[...].astype(w_out_ref.dtype), w_out_ref[...],
                     preferred_element_type=jnp.float32) + b_out_ref[...]  # (Tp, Op)
    lm = jnp.max(logits, axis=1, keepdims=True)
    sh = logits - lm
    lse = jnp.log(jnp.sum(jnp.exp(sh), axis=1, keepdims=True))
    logp_ref[...] = sh - lse                                               # one lane-dense store


# -----------------------------------------------------------------------------
# Parameter construction / packing
# -----------------------------------------------------------------------------
def init_params(key, hidden_size, output_size):
    """Logical (PyTorch-shaped, f32) parameters."""
    H, O = hidden_size, output_size
    ks = jax.random.split(key, 7)
    bound = 1.0 / jnp.sqrt(jnp.float32(H))
    u = lambda k, shp: jax.random.uniform(k, shp, jnp.float32, -bound, bound)
    return {
        "hidden_size": H,
        "output_size": O,
        "embedding": jax.random.normal(ks[0], (O, H), jnp.float32),
        "w_ih_t": u(ks[1], (H, 3 * H)),        # == weight_ih_l0.T  (gate order r, z, n)
        "w_hh_t": u(ks[2], (H, 3 * H)),        # == weight_hh_l0.T
        "b_ih":   u(ks[3], (1, 3 * H)),
        "b_hh":   u(ks[4], (1, 3 * H)),
        "w_out_t": u(ks[5], (H, O)),           # == out.weight.T
        "b_out":  u(ks[6], (1, O)),
    }
    # TODO(synk): nn.GRU dropout_p is inter-layer only and inactive for n_layer=1 / eval; omitted.


def pack_params(params, param_dtype=jnp.bfloat16):
    """One-time padding of weights into lane-dense kernel operands.

    param_dtype applies ONLY to the MXU weights (W_ih, W_hh, W_out); the
    embedding table, biases and all in-kernel gate math stay f32 so the bf16
    default (v6e/v7x) only affects weight storage / matmul precision.
    """
    H, O = params["hidden_size"], params["output_size"]
    Hp, Op = _round_up(H, 128), _round_up(O, 128)

    emb_tab = jnp.zeros((O, 1, Hp), jnp.float32).at[:, 0, :H].set(params["embedding"])

    def pad_gate_w(w_t):                      # (H, 3H) -> (Hp, 3*Hp)
        out = jnp.zeros((Hp, 3 * Hp), param_dtype)
        for g in range(3):
            out = out.at[:H, g * Hp:g * Hp + H].set(
                w_t[:, g * H:(g + 1) * H].astype(param_dtype))
        return out

    def pad_gate_b(b):                        # (1, 3H) -> (1, 3*Hp), f32
        out = jnp.zeros((1, 3 * Hp), jnp.float32)
        for g in range(3):
            out = out.at[:, g * Hp:g * Hp + H].set(b[:, g * H:(g + 1) * H])
        return out

    w_out = jnp.zeros((Hp, Op), param_dtype).at[:H, :O].set(
        params["w_out_t"].astype(param_dtype))
    # padded logit lanes get -1e30 so log_softmax ignores them
    b_out = jnp.full((1, Op), -1e30, jnp.float32).at[:, :O].set(params["b_out"])

    return {"hidden_size": H, "output_size": O, "Hp": Hp, "Op": Op,
            "param_dtype": param_dtype, "emb_tab": emb_tab,
            "w_ih": pad_gate_w(params["w_ih_t"]), "w_hh": pad_gate_w(params["w_hh_t"]),
            "b_ih": pad_gate_b(params["b_ih"]), "b_hh": pad_gate_b(params["b_hh"]),
            "w_out": w_out, "b_out": b_out}


# -----------------------------------------------------------------------------
# Wrappers
# -----------------------------------------------------------------------------
def attention_t_decoder_decode(packed, word_inputs, last_hidden, output_en):
    """Fused T-step decode in ONE kernel invocation (weights DMA'd once).

    word_inputs: (T,) int32 token ids (teacher-forced).  Returns
    (log_probs (T, O), hidden (1, 1, H)); T=1 reproduces the module's forward.
    """
    H, O = packed["hidden_size"], packed["output_size"]
    Hp, Op = packed["Hp"], packed["Op"]

    ids = jnp.asarray(word_inputs, jnp.int32).reshape(-1)
    T = int(ids.shape[0])
    Tp = max(8, _round_up(T, 8))

    # Faithful to `output_en.view(1, H, -1)` (raw row-major reshape, NOT a
    # transpose) -- the "scrambled" ordering is intentional and matched by the
    # reference; then laid out (S, H) so the attention sum is a cheap sublane
    # reduction with a lane-aligned (1, Hp) result.  Kept f32 (activation).
    enc_hs = jnp.reshape(output_en, (H, -1)).astype(jnp.float32)      # (H, S)
    S = enc_hs.shape[1]
    Sp = max(8, _round_up(S, 8))
    enc_sh = jnp.zeros((Sp, Hp), jnp.float32).at[:S, :H].set(enc_hs.T)

    h0 = jnp.zeros((1, Hp), jnp.float32).at[:, :H].set(
        last_hidden.reshape(1, H).astype(jnp.float32))

    kernel = functools.partial(decoder_kernel, T=T)

    # TODO(synk): for production-sized vocabularies on v7x (64 MiB VMEM), swap
    # the resident (O,1,Hp) table for a scalar-prefetch-driven per-row gather
    # (pl.BlockSpec((1,1,Hp), lambda i, ids: (ids[i],0,0))) and set
    # vmem_limit_bytes explicitly; at O=64 the resident table is trivial.
    grid_spec = pltpu.PrefetchScalarGridSpec(
        num_scalar_prefetch=1,
        grid=(1,),                                                     # single invocation
        in_specs=[
            pl.BlockSpec((O, 1, Hp), lambda i, ids_ref: (0, 0, 0)),    # embedding table
            pl.BlockSpec((Sp, Hp), lambda i, ids_ref: (0, 0)),         # encoder outputs
            pl.BlockSpec((Hp, 3 * Hp), lambda i, ids_ref: (0, 0)),     # W_ih.T
            pl.BlockSpec((Hp, 3 * Hp), lambda i, ids_ref: (0, 0)),     # W_hh.T
            pl.BlockSpec((1, 3 * Hp), lambda i, ids_ref: (0, 0)),      # b_ih
            pl.BlockSpec((1, 3 * Hp), lambda i, ids_ref: (0, 0)),      # b_hh
            pl.BlockSpec((1, Hp), lambda i, ids_ref: (0, 0)),          # h0
            pl.BlockSpec((Hp, Op), lambda i, ids_ref: (0, 0)),         # out weight
            pl.BlockSpec((1, Op), lambda i, ids_ref: (0, 0)),          # out bias
        ],
        out_specs=(
            pl.BlockSpec((Tp, Op), lambda i, ids_ref: (0, 0)),         # all log-probs, one store
            pl.BlockSpec((1, Hp), lambda i, ids_ref: (0, 0)),          # final hidden
        ),
        scratch_shapes=[
            pltpu.VMEM((Tp, Hp), jnp.float32),                         # x rows (emb + att)
            pltpu.VMEM((Tp, 3 * Hp), jnp.float32),                     # precomputed gi
            pltpu.VMEM((Tp, Hp), jnp.float32),                         # stashed hidden states
        ],
    )

    logp_pad, h_pad = pl.pallas_call(
        kernel,
        out_shape=(jax.ShapeDtypeStruct((Tp, Op), jnp.float32),
                   jax.ShapeDtypeStruct((1, Hp), jnp.float32)),
        grid_spec=grid_spec,
        compiler_params=pltpu.CompilerParams(
            # the recurrence is serial; single grid step -> "arbitrary".
            # TODO(synk): a batch of independent sequences would add a grid
            # axis marked "parallel" (and batch rows into the sublane dim of
            # the per-step matmul) to use v7x's second TensorCore.
            dimension_semantics=("arbitrary",)),
    )(ids, packed["emb_tab"], enc_sh, packed["w_ih"], packed["w_hh"],
      packed["b_ih"], packed["b_hh"], h0, packed["w_out"], packed["b_out"])

    logp = logp_pad[:T, :O]                         # (T, O)
    hidden = h_pad[:, :H].reshape(1, 1, H)          # (n_layers=1, 1, H)
    return logp, hidden


def attention_t_decoder_forward(packed, word_input, last_hidden, output_en):
    """Exact equivalent of AttentionTDecoderRNN.forward (single step, T=1)."""
    return attention_t_decoder_decode(packed, word_input, last_hidden, output_en)


# -----------------------------------------------------------------------------
# Pure-JAX reference (mirrors the PyTorch module line by line)
# -----------------------------------------------------------------------------
def reference_forward(params, word_input, last_hidden, output_en):
    H = params["hidden_size"]
    we = params["embedding"][word_input].reshape(1, 1, H)
    enc = jnp.reshape(output_en, (1, H, -1)).astype(jnp.float32)
    scores = jnp.einsum("bij,bjk->bik", we, enc)             # (1,1,S)
    attw = jax.nn.softmax(scores, axis=1).reshape(1, -1, 1)  # degenerate softmax (dim=1)
    att = jnp.einsum("bhs,bsk->bhk", enc, attw).reshape(1, 1, H)
    x = (we + att).reshape(1, H)
    h0 = last_hidden.reshape(1, H).astype(jnp.float32)
    gi = x @ params["w_ih_t"] + params["b_ih"]
    gh = h0 @ params["w_hh_t"] + params["b_hh"]
    r = jax.nn.sigmoid(gi[:, :H] + gh[:, :H])
    z = jax.nn.sigmoid(gi[:, H:2 * H] + gh[:, H:2 * H])
    n = jnp.tanh(gi[:, 2 * H:] + r * gh[:, 2 * H:])
    h_new = (1.0 - z) * n + z * h0
    logits = h_new @ params["w_out_t"] + params["b_out"]
    return jax.nn.log_softmax(logits, axis=1), h_new.reshape(1, 1, H)


# -----------------------------------------------------------------------------
if __name__ == "__main__":
    hidden_size, output_size, seq_len = 32, 64, 8

    key = jax.random.PRNGKey(0)
    kp, k1, k2 = jax.random.split(key, 3)
    params = init_params(kp, hidden_size, output_size)
    packed = pack_params(params, jnp.float32)                     # exact f32 path for checks

    word_input = jnp.array([5], dtype=jnp.int32)                  # single token id
    last_hidden = jax.random.normal(k1, (1, 1, hidden_size), jnp.float32)
    output_en = jax.random.normal(k2, (seq_len, 1, hidden_size), jnp.float32)

    # --- single step (== PyTorch module forward) -----------------------------
    logp, hidden = attention_t_decoder_forward(packed, word_input, last_hidden, output_en)
    jax.block_until_ready((logp, hidden))
    ref_logp, ref_hidden = reference_forward(params, word_input, last_hidden, output_en)
    assert jnp.allclose(logp, ref_logp, atol=1e-4), "single-step log-prob mismatch"
    assert jnp.allclose(hidden, ref_hidden, atol=1e-4), "single-step hidden mismatch"

    # --- fused multi-step decode (recurrence fully inside one kernel call) ---
    tokens = jnp.array([5, 1, 7, 3], dtype=jnp.int32)
    logps, hid = attention_t_decoder_decode(packed, tokens, last_hidden, output_en)
    jax.block_until_ready((logps, hid))

    h_ref = last_hidden
    ref_steps = []
    for s in range(tokens.shape[0]):
        lp, h_ref = reference_forward(params, tokens[s:s + 1], h_ref, output_en)
        ref_steps.append(lp)
    ref_logps = jnp.concatenate(ref_steps, axis=0)
    assert jnp.allclose(logps, ref_logps, atol=1e-4), "multi-step log-prob mismatch"
    assert jnp.allclose(hid, h_ref, atol=1e-4), "multi-step hidden mismatch"

    # --- bf16 weight-storage default (v6e/v7x production path): smoke check --
    packed_bf16 = pack_params(params)                             # default: bf16 MXU weights
    lp16, h16 = attention_t_decoder_decode(packed_bf16, tokens, last_hidden, output_en)
    jax.block_until_ready((lp16, h16))
    assert bool(jnp.all(jnp.isfinite(lp16))) and bool(jnp.all(jnp.isfinite(h16)))

    print("KERNEL_OK")
</pallas_src>

<mosaic_0001>
module attributes {stable_mosaic.version = 11 : i64} {
  func.func @decoder_kernel(%arg0: i32, %arg1: memref<1xi32, #tpu.memory_space<smem>>, %arg2: memref<64x1x128xf32, #tpu.memory_space<vmem>>, %arg3: memref<8x128xf32, #tpu.memory_space<vmem>>, %arg4: memref<128x384xf32, #tpu.memory_space<vmem>>, %arg5: memref<128x384xf32, #tpu.memory_space<vmem>>, %arg6: memref<1x384xf32, #tpu.memory_space<vmem>>, %arg7: memref<1x384xf32, #tpu.memory_space<vmem>>, %arg8: memref<1x128xf32, #tpu.memory_space<vmem>>, %arg9: memref<128x128xf32, #tpu.memory_space<vmem>>, %arg10: memref<1x128xf32, #tpu.memory_space<vmem>>, %arg11: memref<8x128xf32, #tpu.memory_space<vmem>>, %arg12: memref<1x128xf32, #tpu.memory_space<vmem>>, %arg13: memref<8x128xf32, #tpu.memory_space<vmem>>, %arg14: memref<8x384xf32, #tpu.memory_space<vmem>>, %arg15: memref<8x128xf32, #tpu.memory_space<vmem>>) attributes {dimension_semantics = [#tpu.dimension_semantics<arbitrary>], iteration_bounds = array<i64: 1>, scalar_prefetch = 1 : i64, scratch_operands = 3 : i64, tpu.core_type = #tpu.core_type<tc>, window_params = [{pipeline_mode = #tpu.pipeline_mode<synchronous>, transform_indices = @transform_0, window_bounds = array<i64: 64, 1, 128>}, {pipeline_mode = #tpu.pipeline_mode<synchronous>, transform_indices = @transform_1, window_bounds = array<i64: 8, 128>}, {pipeline_mode = #tpu.pipeline_mode<synchronous>, transform_indices = @transform_2, window_bounds = array<i64: 128, 384>}, {pipeline_mode = #tpu.pipeline_mode<synchronous>, transform_indices = @transform_3, window_bounds = array<i64: 128, 384>}, {pipeline_mode = #tpu.pipeline_mode<synchronous>, transform_indices = @transform_4, window_bounds = array<i64: 1, 384>}, {pipeline_mode = #tpu.pipeline_mode<synchronous>, transform_indices = @transform_5, window_bounds = array<i64: 1, 384>}, {pipeline_mode = #tpu.pipeline_mode<synchronous>, transform_indices = @transform_6, window_bounds = array<i64: 1, 128>}, {pipeline_mode = #tpu.pipeline_mode<synchronous>, transform_indices = @transform_7, window_bounds = array<i64: 128, 128>}, {pipeline_mode = #tpu.pipeline_mode<synchronous>, transform_indices = @transform_8, window_bounds = array<i64: 1, 128>}, {pipeline_mode = #tpu.pipeline_mode<synchronous>, transform_indices = @transform_9, window_bounds = array<i64: 8, 128>}, {pipeline_mode = #tpu.pipeline_mode<synchronous>, transform_indices = @transform_10, window_bounds = array<i64: 1, 128>}]} {
    %cst = arith.constant 0.000000e+00 : f32
    %0 = vector.broadcast %cst : f32 to vector<8x128xf32>
    %c0 = arith.constant 0 : index
    %c0_0 = arith.constant 0 : index
    %1 = vector.load %arg13[%c0, %c0_0] : memref<8x128xf32, #tpu.memory_space<vmem>>, vector<8x128xf32>
    tpu.vector_store %arg13[%c0, %c0_0], %0 {strides = array<i32>} : memref<8x128xf32, #tpu.memory_space<vmem>>, vector<8x128xf32>,
    %cst_1 = arith.constant 0.000000e+00 : f32
    %2 = vector.broadcast %cst_1 : f32 to vector<8x128xf32>
    %c0_2 = arith.constant 0 : index
    %c0_3 = arith.constant 0 : index
    %3 = vector.load %arg15[%c0_2, %c0_3] : memref<8x128xf32, #tpu.memory_space<vmem>>, vector<8x128xf32>
    tpu.vector_store %arg15[%c0_2, %c0_3], %2 {strides = array<i32>} : memref<8x128xf32, #tpu.memory_space<vmem>>, vector<8x128xf32>,
    %c0_4 = arith.constant 0 : index
    %c0_5 = arith.constant 0 : index
    %4 = vector.load %arg3[%c0_4, %c0_5] : memref<8x128xf32, #tpu.memory_space<vmem>>, vector<8x128xf32>
    %cst_6 = arith.constant dense<0.000000e+00> : vector<128xf32>
    %5 = vector.multi_reduction <add>, %4, %cst_6 [0] : vector<8x128xf32> to vector<128xf32>
    %6 = vector.shape_cast %5 : vector<128xf32> to vector<1x128xf32>
    %c0_7 = arith.constant 0 : index
    %7 = memref.load %arg1[%c0_7] : memref<1xi32, #tpu.memory_space<smem>>
    %8 = arith.index_cast %7 : i32 to index
    %c0_8 = arith.constant 0 : index
    %c0_9 = arith.constant 0 : index
    %9 = vector.load %arg2[%8, %c0_8, %c0_9] : memref<64x1x128xf32, #tpu.memory_space<vmem>>, vector<1x1x128xf32>
    %10 = vector.shape_cast %9 : vector<1x1x128xf32> to vector<1x128xf32>
    %11 = arith.addf %10, %6 : vector<1x128xf32>
    %c0_10 = arith.constant 0 : index
    %c0_11 = arith.constant 0 : index
    %12 = vector.load %arg13[%c0_10, %c0_11] : memref<8x128xf32, #tpu.memory_space<vmem>>, vector<1x128xf32>
    tpu.vector_store %arg13[%c0_10, %c0_11], %11 {strides = array<i32>} : memref<8x128xf32, #tpu.memory_space<vmem>>, vector<1x128xf32>,
    %c0_12 = arith.constant 0 : index
    %c0_13 = arith.constant 0 : index
    %13 = vector.load %arg13[%c0_12, %c0_13] : memref<8x128xf32, #tpu.memory_space<vmem>>, vector<8x128xf32>
    %c0_14 = arith.constant 0 : index
    %c0_15 = arith.constant 0 : index
    %14 = vector.load %arg4[%c0_14, %c0_15] : memref<128x384xf32, #tpu.memory_space<vmem>>, vector<128x384xf32>
    %cst_16 = arith.constant dense<0.000000e+00> : vector<8x384xf32>
    %15 = tpu.matmul %13, %14, %cst_16 {dimension_numbers = #tpu.dot_dimension_numbers<[1], [0], [0], [1], [0, 0, 1, 1], [], []>} : vector<8x128xf32>, vector<128x384xf32>, vector<8x384xf32> -> vector<8x384xf32>
    %c0_17 = arith.constant 0 : index
    %c0_18 = arith.constant 0 : index
    %16 = vector.load %arg6[%c0_17, %c0_18] : memref<1x384xf32, #tpu.memory_space<vmem>>, vector<1x384xf32>
    %17 = vector.broadcast %16 : vector<1x384xf32> to vector<8x384xf32>
    %18 = arith.addf %15, %17 : vector<8x384xf32>
    %c0_19 = arith.constant 0 : index
    %c0_20 = arith.constant 0 : index
    %19 = vector.load %arg14[%c0_19, %c0_20] : memref<8x384xf32, #tpu.memory_space<vmem>>, vector<8x384xf32>
    tpu.vector_store %arg14[%c0_19, %c0_20], %18 {strides = array<i32>} : memref<8x384xf32, #tpu.memory_space<vmem>>, vector<8x384xf32>,
    %c0_21 = arith.constant 0 : index
    %c0_22 = arith.constant 0 : index
    %20 = vector.load %arg8[%c0_21, %c0_22] : memref<1x128xf32, #tpu.memory_space<vmem>>, vector<1x128xf32>
    %c0_i32 = arith.constant 0 : i32
    %c0_23 = arith.constant 0 : index
    %c0_24 = arith.constant 0 : index
    %21 = vector.load %arg5[%c0_23, %c0_24] : memref<128x384xf32, #tpu.memory_space<vmem>>, vector<128x384xf32>
    %cst_25 = arith.constant dense<0.000000e+00> : vector<1x384xf32>
    %22 = tpu.matmul %20, %21, %cst_25 {dimension_numbers = #tpu.dot_dimension_numbers<[1], [0], [0], [1], [0, 0, 1, 1], [], []>} : vector<1x128xf32>, vector<128x384xf32>, vector<1x384xf32> -> vector<1x384xf32>
    %c0_26 = arith.constant 0 : index
    %c0_27 = arith.constant 0 : index
    %23 = vector.load %arg7[%c0_26, %c0_27] : memref<1x384xf32, #tpu.memory_space<vmem>>, vector<1x384xf32>
    %24 = arith.addf %22, %23 : vector<1x384xf32>
    %25 = arith.index_cast %c0_i32 : i32 to index
    %c0_28 = arith.constant 0 : index
    %26 = vector.load %arg14[%25, %c0_28] : memref<8x384xf32, #tpu.memory_space<vmem>>, vector<1x384xf32>
    %27 = vector.extract_strided_slice %26 {offsets = [0, 0], sizes = [1, 128], strides = [1, 1]} : vector<1x384xf32> to vector<1x128xf32>
    %28 = vector.extract_strided_slice %24 {offsets = [0, 0], sizes = [1, 128], strides = [1, 1]} : vector<1x384xf32> to vector<1x128xf32>
    %29 = arith.addf %27, %28 : vector<1x128xf32>
    %30 = arith.negf %29 : vector<1x128xf32>
    %31 = math.exp %30 : vector<1x128xf32>
    %cst_29 = arith.constant 1.000000e+00 : f32
    %32 = vector.broadcast %cst_29 : f32 to vector<1x128xf32>
    %33 = arith.addf %32, %31 : vector<1x128xf32>
    %34 = arith.divf %32, %33 : vector<1x128xf32>
    %35 = vector.extract_strided_slice %26 {offsets = [0, 128], sizes = [1, 128], strides = [1, 1]} : vector<1x384xf32> to vector<1x128xf32>
    %36 = vector.extract_strided_slice %24 {offsets = [0, 128], sizes = [1, 128], strides = [1, 1]} : vector<1x384xf32> to vector<1x128xf32>
    %37 = arith.addf %35, %36 : vector<1x128xf32>
    %38 = arith.negf %37 : vector<1x128xf32>
    %39 = math.exp %38 : vector<1x128xf32>
    %cst_30 = arith.constant 1.000000e+00 : f32
    %40 = vector.broadcast %cst_30 : f32 to vector<1x128xf32>
    %41 = arith.addf %40, %39 : vector<1x128xf32>
    %42 = arith.divf %40, %41 : vector<1x128xf32>
    %43 = vector.extract_strided_slice %26 {offsets = [0, 256], sizes = [1, 128], strides = [1, 1]} : vector<1x384xf32> to vector<1x128xf32>
    %44 = vector.extract_strided_slice %24 {offsets = [0, 256], sizes = [1, 128], strides = [1, 1]} : vector<1x384xf32> to vector<1x128xf32>
    %45 = arith.mulf %34, %44 : vector<1x128xf32>
    %46 = arith.addf %43, %45 : vector<1x128xf32>
    %47 = math.tanh %46 : vector<1x128xf32>
    %cst_31 = arith.constant 1.000000e+00 : f32
    %48 = vector.broadcast %cst_31 : f32 to vector<1x128xf32>
    %49 = arith.subf %48, %42 : vector<1x128xf32>
    %50 = arith.mulf %49, %47 : vector<1x128xf32>
    %51 = arith.mulf %42, %20 : vector<1x128xf32>
    %52 = arith.addf %50, %51 : vector<1x128xf32>
    %53 = arith.index_cast %c0_i32 : i32 to index
    %c0_32 = arith.constant 0 : index
    %54 = vector.load %arg15[%53, %c0_32] : memref<8x128xf32, #tpu.memory_space<vmem>>, vector<1x128xf32>
    tpu.vector_store %arg15[%53, %c0_32], %52 {strides = array<i32>} : memref<8x128xf32, #tpu.memory_space<vmem>>, vector<1x128xf32>,
    %c1_i32 = arith.constant 1 : i32
    %c0_33 = arith.constant 0 : index
    %c0_34 = arith.constant 0 : index
    %55 = vector.load %arg12[%c0_33, %c0_34] : memref<1x128xf32, #tpu.memory_space<vmem>>, vector<1x128xf32>
    tpu.vector_store %arg12[%c0_33, %c0_34], %52 {strides = array<i32>} : memref<1x128xf32, #tpu.memory_space<vmem>>, vector<1x128xf32>,
    %c0_35 = arith.constant 0 : index
    %c0_36 = arith.constant 0 : index
    %56 = vector.load %arg15[%c0_35, %c0_36] : memref<8x128xf32, #tpu.memory_space<vmem>>, vector<8x128xf32>
    %c0_37 = arith.constant 0 : index
    %c0_38 = arith.constant 0 : index
    %57 = vector.load %arg9[%c0_37, %c0_38] : memref<128x128xf32, #tpu.memory_space<vmem>>, vector<128x128xf32>
    %cst_39 = arith.constant dense<0.000000e+00> : vector<8x128xf32>
    %58 = tpu.matmul %56, %57, %cst_39 {dimension_numbers = #tpu.dot_dimension_numbers<[1], [0], [0], [1], [0, 0, 1, 1], [], []>} : vector<8x128xf32>, vector<128x128xf32>, vector<8x128xf32> -> vector<8x128xf32>
    %c0_40 = arith.constant 0 : index
    %c0_41 = arith.constant 0 : index
    %59 = vector.load %arg10[%c0_40, %c0_41] : memref<1x128xf32, #tpu.memory_space<vmem>>, vector<1x128xf32>
    %60 = vector.broadcast %59 : vector<1x128xf32> to vector<8x128xf32>
    %61 = arith.addf %58, %60 : vector<8x128xf32>
    %cst_42 = arith.constant dense<0xFF800000> : vector<8xf32>
    %62 = vector.multi_reduction <maximumf>, %61, %cst_42 [1] : vector<8x128xf32> to vector<8xf32>
    %63 = vector.shape_cast %62 : vector<8xf32> to vector<8x1xf32>
    %64 = vector.broadcast %63 : vector<8x1xf32> to vector<8x128xf32>
    %65 = arith.subf %61, %64 : vector<8x128xf32>
    %66 = math.exp %65 : vector<8x128xf32>
    %cst_43 = arith.constant dense<0.000000e+00> : vector<8xf32>
    %67 = vector.multi_reduction <add>, %66, %cst_43 [1] : vector<8x128xf32> to vector<8xf32>
    %68 = vector.shape_cast %67 : vector<8xf32> to vector<8x1xf32>
    %69 = math.log %68 : vector<8x1xf32>
    %70 = vector.broadcast %69 : vector<8x1xf32> to vector<8x128xf32>
    %71 = arith.subf %65, %70 : vector<8x128xf32>
    %c0_44 = arith.constant 0 : index
    %c0_45 = arith.constant 0 : index
    %72 = vector.load %arg11[%c0_44, %c0_45] : memref<8x128xf32, #tpu.memory_space<vmem>>, vector<8x128xf32>
    tpu.vector_store %arg11[%c0_44, %c0_45], %71 {strides = array<i32>} : memref<8x128xf32, #tpu.memory_space<vmem>>, vector<8x128xf32>,
    return
  }
  func.func @transform_0(%arg0: i32, %arg1: memref<1xi32, #tpu.memory_space<smem>>) -> (i32, i32, i32) {
    %c0_i32 = arith.constant 0 : i32
    %c0_i32_0 = arith.constant 0 : i32
    %c0_i32_1 = arith.constant 0 : i32
    %c0_i32_2 = arith.constant 0 : i32
    return %c0_i32, %c0_i32_0, %c0_i32_1 : i32, i32, i32
  }
  func.func @transform_1(%arg0: i32, %arg1: memref<1xi32, #tpu.memory_space<smem>>) -> (i32, i32) {
    %c0_i32 = arith.constant 0 : i32
    %c0_i32_0 = arith.constant 0 : i32
    %c0_i32_1 = arith.constant 0 : i32
    return %c0_i32, %c0_i32_0 : i32, i32
  }
  func.func @transform_2(%arg0: i32, %arg1: memref<1xi32, #tpu.memory_space<smem>>) -> (i32, i32) {
    %c0_i32 = arith.constant 0 : i32
    %c0_i32_0 = arith.constant 0 : i32
    %c0_i32_1 = arith.constant 0 : i32
    return %c0_i32, %c0_i32_0 : i32, i32
  }
  func.func @transform_3(%arg0: i32, %arg1: memref<1xi32, #tpu.memory_space<smem>>) -> (i32, i32) {
    %c0_i32 = arith.constant 0 : i32
    %c0_i32_0 = arith.constant 0 : i32
    %c0_i32_1 = arith.constant 0 : i32
    return %c0_i32, %c0_i32_0 : i32, i32
  }
  func.func @transform_4(%arg0: i32, %arg1: memref<1xi32, #tpu.memory_space<smem>>) -> (i32, i32) {
    %c0_i32 = arith.constant 0 : i32
    %c0_i32_0 = arith.constant 0 : i32
    %c0_i32_1 = arith.constant 0 : i32
    return %c0_i32, %c0_i32_0 : i32, i32
  }
  func.func @transform_5(%arg0: i32, %arg1: memref<1xi32, #tpu.memory_space<smem>>) -> (i32, i32) {
    %c0_i32 = arith.constant 0 : i32
    %c0_i32_0 = arith.constant 0 : i32
    %c0_i32_1 = arith.constant 0 : i32
    return %c0_i32, %c0_i32_0 : i32, i32
  }
  func.func @transform_6(%arg0: i32, %arg1: memref<1xi32, #tpu.memory_space<smem>>) -> (i32, i32) {
    %c0_i32 = arith.constant 0 : i32
    %c0_i32_0 = arith.constant 0 : i32
    %c0_i32_1 = arith.constant 0 : i32
    return %c0_i32, %c0_i32_0 : i32, i32
  }
  func.func @transform_7(%arg0: i32, %arg1: memref<1xi32, #tpu.memory_space<smem>>) -> (i32, i32) {
    %c0_i32 = arith.constant 0 : i32
    %c0_i32_0 = arith.constant 0 : i32
    %c0_i32_1 = arith.constant 0 : i32
    return %c0_i32, %c0_i32_0 : i32, i32
  }
  func.func @transform_8(%arg0: i32, %arg1: memref<1xi32, #tpu.memory_space<smem>>) -> (i32, i32) {
    %c0_i32 = arith.constant 0 : i32
    %c0_i32_0 = arith.constant 0 : i32
    %c0_i32_1 = arith.constant 0 : i32
    return %c0_i32, %c0_i32_0 : i32, i32
  }
  func.func @transform_9(%arg0: i32, %arg1: memref<1xi32, #tpu.memory_space<smem>>) -> (i32, i32) {
    %c0_i32 = arith.constant 0 : i32
    %c0_i32_0 = arith.constant 0 : i32
    %c0_i32_1 = arith.constant 0 : i32
    return %c0_i32, %c0_i32_0 : i32, i32
  }
  func.func @transform_10(%arg0: i32, %arg1: memref<1xi32, #tpu.memory_space<smem>>) -> (i32, i32) {
    %c0_i32 = arith.constant 0 : i32
    %c0_i32_0 = arith.constant 0 : i32
    %c0_i32_1 = arith.constant 0 : i32
    return %c0_i32, %c0_i32_0 : i32, i32
  }
}

</mosaic_0001>

<llo_original>
// kernel: tpu_custom_call.1
$region0: #{tpu_custom_call.1}
  #allocation0 [shape = 'u32[]', space=smem, size = 0x4, offset = 0x4, fixed_abs, tag = 'smem constant byte address 0x4 - core index']
  #allocation1 [shape = 'u32[144,128]{1,0:T(1,128)}', space=vmem, size = 0x12000, scoped, tag = 'internal scratch']
  #allocation2 [shape = 'f32[8,128]{1,0:T(8,128)}', space=vmem, size = 0x1000, scoped, tag = 'scratch operand']
  #allocation3 [shape = 'f32[8,384]{1,0:T(8,128)}', space=vmem, size = 0x3000, scoped, tag = 'scratch operand']
  #allocation4 [shape = 'f32[8,128]{1,0:T(8,128)}', space=vmem, size = 0x1000, scoped, tag = 'scratch operand']
  #allocation5 [shape = 's32[1]{0}', space=sflag, size = 0x4, scoped, tag = 'scoped memory for tpu_custom_call.1']
  #allocation6 [shape = 's32[1]{0:T(128)S(6)}', space=smem, size = 0x200, scoped, tag = 'prefetched SMEM operand 0']
  %s0 = inlined_call_operand.<no memory space> [shape: s32[1], index: 0, kind: input, shape index: {}]
  %s1 = inlined_call_operand.hbm [shape: f32[64,1,128], index: 1, kind: input, shape index: {}]
  %s2 = inlined_call_operand.hbm [shape: f32[8,128], index: 2, kind: input, shape index: {}]
  %s3 = inlined_call_operand.hbm [shape: f32[128,384], index: 3, kind: input, shape index: {}]
  %s4 = inlined_call_operand.hbm [shape: f32[128,384], index: 4, kind: input, shape index: {}]
  %s5 = inlined_call_operand.vmem [shape: f32[1,384], index: 5, kind: input, shape index: {}]
  %s6 = inlined_call_operand.vmem [shape: f32[1,384], index: 6, kind: input, shape index: {}]
  %s7 = inlined_call_operand.vmem [shape: f32[1,128], index: 7, kind: input, shape index: {}]
  %s8 = inlined_call_operand.hbm [shape: f32[128,128], index: 8, kind: input, shape index: {}]
  %s9 = inlined_call_operand.vmem [shape: f32[1,128], index: 9, kind: input, shape index: {}]
  %s10 = inlined_call_operand.hbm [shape: f32[8,128], index: 10, kind: output, shape index: {0}]
  %s11 = inlined_call_operand.hbm [shape: f32[1,128], index: 11, kind: output, shape index: {1}]
  %12 = xla_tuple %s10, %s11
  %s13 = sld [smem:[#allocation0]]
  $region74: #{tpu_custom_call.1} parent=0
    _
  %s15 = ssub.s32 1, %s13
  %s16 = scalar_select 0, %s15, %s13
  %17 = sst [smem:[#allocation6]] %s0
  $region1: #{tpu_custom_call.1} parent=0
    #allocation7 [shape = 'u8[32768]{0}', space=vmem, size = 0x8000, scoped, tag = 'input window, operand 1, single buffered']
    #allocation8 [shape = 's32[1]{0}', space=sflag, size = 0x4, scoped, tag = 'scoped memory for tpu_custom_call.1']
    #allocation9 [shape = 's32[1]{0}', space=sflag, size = 0x4, scoped, tag = 'scoped memory for tpu_custom_call.1']
    #allocation10 [shape = 'u8[4096]{0}', space=vmem, size = 0x1000, scoped, tag = 'input window, operand 2, single buffered']
    #allocation11 [shape = 's32[1]{0}', space=sflag, size = 0x4, scoped, tag = 'scoped memory for tpu_custom_call.1']
    #allocation12 [shape = 'u8[196608]{0}', space=vmem, size = 0x30000, scoped, tag = 'input window, operand 3, single buffered']
    #allocation13 [shape = 'u8[196608]{0}', space=vmem, size = 0x30000, scoped, tag = 'input window, operand 4, single buffered']
    #allocation14 [shape = 's32[1]{0}', space=sflag, size = 0x4, scoped, tag = 'scoped memory for tpu_custom_call.1']
    #allocation15 [shape = 'u8[65536]{0}', space=vmem, size = 0x10000, scoped, tag = 'input window, operand 8, single buffered']
    #allocation16 [shape = 'u8[4096]{0}', space=vmem, size = 0x1000, scoped, tag = 'output window, operand 0, single buffered']
    #allocation17 [shape = 'u8[512]{0}', space=vmem, size = 0x400, scoped, tag = 'output window, operand 1, single buffered']
    #allocation18 [shape = 's32[1]{0}', space=sflag, size = 0x4, scoped, tag = 'scoped memory for tpu_custom_call.1']
    %18 = vsyncpa [#allocation8], 0
    %19 = vsyncpa [#allocation11], 0
    %20 = vsyncpa [#allocation14], 0
    %21 = vsyncpa [#allocation9], 0
    %22 = vsyncpa [#allocation18], 0
    // Predicated region
    $region2: #{tpu_custom_call.1} parent=1 // pred_check
      _
    $region3: #{tpu_custom_call.1} parent=1 // pred_check_branch
      %24 = sbr.rel (0) target = $region5
    $region4: #{tpu_custom_call.1} parent=1 // pred_region
      %s26 = ssub.s32 1024, 1024
      %27 = vsyncadd [#allocation8], %s26
      %s28 = sshll.u32 [#allocation7], 4
      %s29 = int_to_ptr.vmem [resolvable:$true] %s28
      %34 = dma.hbm_to_vmem [thread:$0]  %s1, 1024, %s29, [#allocation8], 16, 16, 1
    $region5: #{tpu_custom_call.1} parent=1 // pred_fallthru
      _
    // Predicated region
    $region6: #{tpu_custom_call.1} parent=1 // pred_check
      _
    $region7: #{tpu_custom_call.1} parent=1 // pred_check_branch
      %36 = sbr.rel (0) target = $region9
    $region8: #{tpu_custom_call.1} parent=1 // pred_region
      %s38 = ssub.s32 128, 128
      %39 = vsyncadd [#allocation11], %s38
      %s41 = sshll.u32 [#allocation10], 4
      %s42 = int_to_ptr.vmem [resolvable:$true] %s41
      %44 = dma.hbm_to_vmem [thread:$0]  %s2, 128, %s42, [#allocation11]
    $region9: #{tpu_custom_call.1} parent=1 // pred_fallthru
      _
    // Predicated region
    $region10: #{tpu_custom_call.1} parent=1 // pred_check
      _
    $region11: #{tpu_custom_call.1} parent=1 // pred_check_branch
      %46 = sbr.rel (0) target = $region13
    $region12: #{tpu_custom_call.1} parent=1 // pred_region
      %s48 = ssub.s32 6144, 6144
      %49 = vsyncadd [#allocation11], %s48
      %s50 = sshll.u32 [#allocation12], 4
      %s51 = int_to_ptr.vmem [resolvable:$true] %s50
      %56 = dma.hbm_to_vmem [thread:$0]  %s3, 6144, %s51, [#allocation11], 384, 384, 24
    $region13: #{tpu_custom_call.1} parent=1 // pred_fallthru
      _
    // Predicated region
    $region14: #{tpu_custom_call.1} parent=1 // pred_check
      _
    $region15: #{tpu_custom_call.1} parent=1 // pred_check_branch
      %58 = sbr.rel (0) target = $region17
    $region16: #{tpu_custom_call.1} parent=1 // pred_region
      %s60 = ssub.s32 6144, 6144
      %61 = vsyncadd [#allocation14], %s60
      %s62 = sshll.u32 [#allocation13], 4
      %s63 = int_to_ptr.vmem [resolvable:$true] %s62
      %68 = dma.hbm_to_vmem [thread:$0]  %s4, 6144, %s63, [#allocation14], 384, 384, 24
    $region17: #{tpu_custom_call.1} parent=1 // pred_fallthru
      _
    // Predicated region
    $region18: #{tpu_custom_call.1} parent=1 // pred_check
      _
    $region19: #{tpu_custom_call.1} parent=1 // pred_check_branch
      %70 = sbr.rel (0) target = $region21
    $region20: #{tpu_custom_call.1} parent=1 // pred_region
      _
    $region21: #{tpu_custom_call.1} parent=1 // pred_fallthru
      _
    // Predicated region
    $region22: #{tpu_custom_call.1} parent=1 // pred_check
      _
    $region23: #{tpu_custom_call.1} parent=1 // pred_check_branch
      %72 = sbr.rel (0) target = $region25
    $region24: #{tpu_custom_call.1} parent=1 // pred_region
      _
    $region25: #{tpu_custom_call.1} parent=1 // pred_fallthru
      _
    // Predicated region
    $region26: #{tpu_custom_call.1} parent=1 // pred_check
      _
    $region27: #{tpu_custom_call.1} parent=1 // pred_check_branch
      %74 = sbr.rel (0) target = $region29
    $region28: #{tpu_custom_call.1} parent=1 // pred_region
      _
    $region29: #{tpu_custom_call.1} parent=1 // pred_fallthru
      _
    // Predicated region
    $region30: #{tpu_custom_call.1} parent=1 // pred_check
      _
    $region31: #{tpu_custom_call.1} parent=1 // pred_check_branch
      %76 = sbr.rel (0) target = $region33
    $region32: #{tpu_custom_call.1} parent=1 // pred_region
      %s78 = ssub.s32 2048, 2048
      %79 = vsyncadd [#allocation14], %s78
      %s80 = sshll.u32 [#allocation15], 4
      %s81 = int_to_ptr.vmem [resolvable:$true] %s80
      %86 = dma.hbm_to_vmem [thread:$0]  %s8, 2048, %s81, [#allocation14], 128, 128, 8
    $region33: #{tpu_custom_call.1} parent=1 // pred_fallthru
      _
    // Predicated region
    $region34: #{tpu_custom_call.1} parent=1 // pred_check
      _
    $region35: #{tpu_custom_call.1} parent=1 // pred_check_branch
      %88 = sbr.rel (0) target = $region37
    $region36: #{tpu_custom_call.1} parent=1 // pred_region
      _
    $region37: #{tpu_custom_call.1} parent=1 // pred_fallthru
      _
    // Predicated region
    $region38: #{tpu_custom_call.1} parent=1 // pred_check
      _
    $region39: #{tpu_custom_call.1} parent=1 // pred_check_branch
      %90 = sbr.rel (0) target = $region41
    $region40: #{tpu_custom_call.1} parent=1 // pred_region
      %91 = dma.done [#allocation8], 1024
    $region41: #{tpu_custom_call.1} parent=1 // pred_fallthru
      _
    // Predicated region
    $region42: #{tpu_custom_call.1} parent=1 // pred_check
      _
    $region43: #{tpu_custom_call.1} parent=1 // pred_check_branch
      %93 = sbr.rel (0) target = $region45
    $region44: #{tpu_custom_call.1} parent=1 // pred_region
      %94 = dma.done [#allocation11], 128
    $region45: #{tpu_custom_call.1} parent=1 // pred_fallthru
      _
    // Predicated region
    $region46: #{tpu_custom_call.1} parent=1 // pred_check
      _
    $region47: #{tpu_custom_call.1} parent=1 // pred_check_branch
      %96 = sbr.rel (0) target = $region49
    $region48: #{tpu_custom_call.1} parent=1 // pred_region
      %97 = dma.done [#allocation11], 6144
    $region49: #{tpu_custom_call.1} parent=1 // pred_fallthru
      _
    // Predicated region
    $region50: #{tpu_custom_call.1} parent=1 // pred_check
      _
    $region51: #{tpu_custom_call.1} parent=1 // pred_check_branch
      %99 = sbr.rel (0) target = $region53
    $region52: #{tpu_custom_call.1} parent=1 // pred_region
      %100 = dma.done [#allocation14], 6144
    $region53: #{tpu_custom_call.1} parent=1 // pred_fallthru
      _
    // Predicated region
    $region54: #{tpu_custom_call.1} parent=1 // pred_check
      _
    $region55: #{tpu_custom_call.1} parent=1 // pred_check_branch
      %102 = sbr.rel (0) target = $region57
    $region56: #{tpu_custom_call.1} parent=1 // pred_region
      %103 = dma.done [#allocation14], 2048
    $region57: #{tpu_custom_call.1} parent=1 // pred_fallthru
      _
    %104 = vst [vmem:[#allocation2] sm:$0xff] 0.0
    %105 = vst [vmem:[#allocation4] sm:$0xff] 0.0
    %v106 = vld [vmem:[#allocation10] sm:$0xff]
    %v107 = vrot.slane %v106, 4
    %v108 = vadd.f32 %v106, %v107
    %v109 = vrot.slane %v108, 2
    %v110 = vadd.f32 %v108, %v109
    %v111 = vrot.slane %v110, 1
    %v112 = vadd.f32 %v110, %v111
    %s113 = sld [smem:[#allocation6]]
    %s114 = scalar_lea.vmem [#allocation7], %s113
    %v115 = vld [vmem:[%s114] sm:$0x1]
    %v116 = vadd.f32 %v115, %v112
    %117 = vst [vmem:[#allocation2] sm:$0x1] %v116
    %v118 = vld [vmem:[#allocation2] sm:$0xff]
    %v119 = vld [vmem:[#allocation12] sm:$0xff]
    %v120 = vld [vmem:[#allocation12 + $0x8] sm:$0xff]
    %v121 = vld [vmem:[#allocation12 + $0x10] sm:$0xff]
    %v122 = vld [vmem:[#allocation12 + $0x18] sm:$0xff]
    %v123 = vld [vmem:[#allocation12 + $0x20] sm:$0xff]
    %v124 = vld [vmem:[#allocation12 + $0x28] sm:$0xff]
    %v125 = vld [vmem:[#allocation12 + $0x30] sm:$0xff]
    %v126 = vld [vmem:[#allocation12 + $0x38] sm:$0xff]
    %v127 = vld [vmem:[#allocation12 + $0x40] sm:$0xff]
    %v128 = vld [vmem:[#allocation12 + $0x48] sm:$0xff]
    %v129 = vld [vmem:[#allocation12 + $0x50] sm:$0xff]
    %v130 = vld [vmem:[#allocation12 + $0x58] sm:$0xff]
    %v131 = vld [vmem:[#allocation12 + $0x60] sm:$0xff]
    %v132 = vld [vmem:[#allocation12 + $0x68] sm:$0xff]
    %v133 = vld [vmem:[#allocation12 + $0x70] sm:$0xff]
    %v134 = vld [vmem:[#allocation12 + $0x78] sm:$0xff]
    %v135 = vld [vmem:[#allocation12 + $0x80] sm:$0xff]
    %v136 = vld [vmem:[#allocation12 + $0x88] sm:$0xff]
    %v137 = vld [vmem:[#allocation12 + $0x90] sm:$0xff]
    %v138 = vld [vmem:[#allocation12 + $0x98] sm:$0xff]
    %v139 = vld [vmem:[#allocation12 + $0xa0] sm:$0xff]
    %v140 = vld [vmem:[#allocation12 + $0xa8] sm:$0xff]
    %v141 = vld [vmem:[#allocation12 + $0xb0] sm:$0xff]
    %v142 = vld [vmem:[#allocation12 + $0xb8] sm:$0xff]
    %v143 = vld [vmem:[#allocation12 + $0xc0] sm:$0xff]
    %v144 = vld [vmem:[#allocation12 + $0xc8] sm:$0xff]
    %v145 = vld [vmem:[#allocation12 + $0xd0] sm:$0xff]
    %v146 = vld [vmem:[#allocation12 + $0xd8] sm:$0xff]
    %v147 = vld [vmem:[#allocation12 + $0xe0] sm:$0xff]
    %v148 = vld [vmem:[#allocation12 + $0xe8] sm:$0xff]
    %v149 = vld [vmem:[#allocation12 + $0xf0] sm:$0xff]
    %v150 = vld [vmem:[#allocation12 + $0xf8] sm:$0xff]
    %v151 = vld [vmem:[#allocation12 + $0x100] sm:$0xff]
    %v152 = vld [vmem:[#allocation12 + $0x108] sm:$0xff]
    %v153 = vld [vmem:[#allocation12 + $0x110] sm:$0xff]
    %v154 = vld [vmem:[#allocation12 + $0x118] sm:$0xff]
    %v155 = vld [vmem:[#allocation12 + $0x120] sm:$0xff]
    %v156 = vld [vmem:[#allocation12 + $0x128] sm:$0xff]
    %v157 = vld [vmem:[#allocation12 + $0x130] sm:$0xff]
    %v158 = vld [vmem:[#allocation12 + $0x138] sm:$0xff]
    %v159 = vld [vmem:[#allocation12 + $0x140] sm:$0xff]
    %v160 = vld [vmem:[#allocation12 + $0x148] sm:$0xff]
    %v161 = vld [vmem:[#allocation12 + $0x150] sm:$0xff]
    %v162 = vld [vmem:[#allocation12 + $0x158] sm:$0xff]
    %v163 = vld [vmem:[#allocation12 + $0x160] sm:$0xff]
    %v164 = vld [vmem:[#allocation12 + $0x168] sm:$0xff]
    %v165 = vld [vmem:[#allocation12 + $0x170] sm:$0xff]
    %v166 = vld [vmem:[#allocation12 + $0x178] sm:$0xff]
    %v167 = vld [vmem:[%s5] sm:$0x7]
    %v169 = vlaneseq
    %v170 = vshrl.u32 %v169, 7
    %v171 = vsub.s32 0, %v170
    %v172 = vrot.slane %v167, %v171
    %v173 = vlaneseq
    %v174 = vshrl.u32 %v173, 7
    %v175 = vsub.s32 1, %v174
    %v176 = vrot.slane %v167, %v175
    %v177 = vlaneseq
    %v178 = vshrl.u32 %v177, 7
    %v179 = vsub.s32 2, %v178
    %v180 = vrot.slane %v167, %v179
    %184 = vmatprep.subr.mxu0 %v120
    %185 = vmatpush1.msra.mxu0 %v119
    %186 = vmatprep.subr.mxu0 %v123
    %187 = vmatpush1.msra.mxu0 %v122
    %188 = vmatprep.subr.mxu0 %v126
    %189 = vmatpush1.msra.mxu0 %v125
    %190 = vmatprep.subr.mxu0 %v129
    %191 = vmatpush1.msra.mxu0 %v128
    %192 = vmatprep.subr.mxu0 %v132
    %193 = vmatpush1.msra.mxu0 %v131
    %194 = vmatprep.subr.mxu0 %v135
    %195 = vmatpush1.msra.mxu0 %v134
    %196 = vmatprep.subr.mxu0 %v138
    %197 = vmatpush1.msra.mxu0 %v137
    %198 = vmatprep.subr.mxu0 %v141
    %199 = vmatpush1.msra.mxu0 %v140
    %200 = vmatprep.subr.mxu0 %v144
    %201 = vmatpush1.msra.mxu0 %v143
    %202 = vmatprep.subr.mxu0 %v147
    %203 = vmatpush1.msra.mxu0 %v146
    %204 = vmatprep.subr.mxu0 %v150
    %205 = vmatpush1.msra.mxu0 %v149
    %206 = vmatprep.subr.mxu0 %v153
    %207 = vmatpush1.msra.mxu0 %v152
    %208 = vmatprep.subr.mxu0 %v156
    %209 = vmatpush1.msra.mxu0 %v155
    %210 = vmatprep.subr.mxu0 %v159
    %211 = vmatpush1.msra.mxu0 %v158
    %212 = vmatprep.subr.mxu0 %v162
    %213 = vmatpush1.msra.mxu0 %v161
    %214 = vmatprep.subr.mxu0 %v165
    %215 = vmatpush1.msra.mxu0 %v164
    %216 = vmatprep.subr.mxu0 0.0
    %217 = vmatpush1.msra.mxu0 0.0
    %218 = vmatprep.subr.mxu0 0.0
    %219 = vmatpush1.msra.mxu0 0.0
    %220 = vmatprep.subr.mxu0 0.0
    %221 = vmatpush1.msra.mxu0 0.0
    %222 = vmatprep.subr.mxu0 0.0
    %223 = vmatpush1.msra.mxu0 0.0
    %224 = vmatprep.subr.mxu0 0.0
    %225 = vmatpush1.msra.mxu0 0.0
    %226 = vmatprep.subr.mxu0 0.0
    %227 = vmatpush1.msra.mxu0 0.0
    %228 = vmatprep.subr.mxu0 0.0
    %229 = vmatpush1.msra.mxu0 0.0
    %230 = vmatprep.subr.mxu0 0.0
    %231 = vmatpush1.msra.mxu0 0.0
    %232 = vmatprep.subr.mxu0 0.0
    %233 = vmatpush1.msra.mxu0 0.0
    %234 = vmatprep.subr.mxu0 0.0
    %235 = vmatpush1.msra.mxu0 0.0
    %236 = vmatprep.subr.mxu0 0.0
    %237 = vmatpush1.msra.mxu0 0.0
    %238 = vmatprep.subr.mxu0 0.0
    %239 = vmatpush1.msra.mxu0 0.0
    %240 = vmatprep.subr.mxu0 0.0
    %241 = vmatpush1.msra.mxu0 0.0
    %242 = vmatprep.subr.mxu0 0.0
    %243 = vmatpush1.msra.mxu0 0.0
    %244 = vmatprep.subr.mxu0 0.0
    %245 = vmatpush1.msra.mxu0 0.0
    %246 = vmatprep.subr.mxu0 0.0
    %247 = vmatpush1.msra.mxu0 0.0
    %248 = vmatprep.mubr.f32.mxu0 0.0
    %249 = vmatmul.mubr.f32.gmra.mrb[0].mxu0 %v118
    %v250 = vpop.f32.mrb[0].mxu0
    %v251 = vadd.f32 %v172, %v250
    %v252 = vpop.f32.mrb[0].mxu0
    %v253 = vadd.f32 %v176, %v252
    %254 = vdwg.mxu0
    %255 = vmatprep.subr.mxu0 0.0
    %256 = vmatpush1.msra.mxu0 %v121
    %257 = vmatprep.subr.mxu0 0.0
    %258 = vmatpush1.msra.mxu0 %v124
    %259 = vmatprep.subr.mxu0 0.0
    %260 = vmatpush1.msra.mxu0 %v127
    %261 = vmatprep.subr.mxu0 0.0
    %262 = vmatpush1.msra.mxu0 %v130
    %263 = vmatprep.subr.mxu0 0.0
    %264 = vmatpush1.msra.mxu0 %v133
    %265 = vmatprep.subr.mxu0 0.0
    %266 = vmatpush1.msra.mxu0 %v136
    %267 = vmatprep.subr.mxu0 0.0
    %268 = vmatpush1.msra.mxu0 %v139
    %269 = vmatprep.subr.mxu0 0.0
    %270 = vmatpush1.msra.mxu0 %v142
    %271 = vmatprep.subr.mxu0 0.0
    %272 = vmatpush1.msra.mxu0 %v145
    %273 = vmatprep.subr.mxu0 0.0
    %274 = vmatpush1.msra.mxu0 %v148
    %275 = vmatprep.subr.mxu0 0.0
    %276 = vmatpush1.msra.mxu0 %v151
    %277 = vmatprep.subr.mxu0 0.0
    %278 = vmatpush1.msra.mxu0 %v154
    %279 = vmatprep.subr.mxu0 0.0
    %280 = vmatpush1.msra.mxu0 %v157
    %281 = vmatprep.subr.mxu0 0.0
    %282 = vmatpush1.msra.mxu0 %v160
    %283 = vmatprep.subr.mxu0 0.0
    %284 = vmatpush1.msra.mxu0 %v163
    %285 = vmatprep.subr.mxu0 0.0
    %286 = vmatpush1.msra.mxu0 %v166
    %287 = vmatprep.subr.mxu0 0.0
    %288 = vmatpush1.msra.mxu0 0.0
    %289 = vmatprep.subr.mxu0 0.0
    %290 = vmatpush1.msra.mxu0 0.0
    %291 = vmatprep.subr.mxu0 0.0
    %292 = vmatpush1.msra.mxu0 0.0
    %293 = vmatprep.subr.mxu0 0.0
    %294 = vmatpush1.msra.mxu0 0.0
    %295 = vmatprep.subr.mxu0 0.0
    %296 = vmatpush1.msra.mxu0 0.0
    %297 = vmatprep.subr.mxu0 0.0
    %298 = vmatpush1.msra.mxu0 0.0
    %299 = vmatprep.subr.mxu0 0.0
    %300 = vmatpush1.msra.mxu0 0.0
    %301 = vmatprep.subr.mxu0 0.0
    %302 = vmatpush1.msra.mxu0 0.0
    %303 = vmatprep.subr.mxu0 0.0
    %304 = vmatpush1.msra.mxu0 0.0
    %305 = vmatprep.subr.mxu0 0.0
    %306 = vmatpush1.msra.mxu0 0.0
    %307 = vmatprep.subr.mxu0 0.0
    %308 = vmatpush1.msra.mxu0 0.0
    %309 = vmatprep.subr.mxu0 0.0
    %310 = vmatpush1.msra.mxu0 0.0
    %311 = vmatprep.subr.mxu0 0.0
    %312 = vmatpush1.msra.mxu0 0.0
    %313 = vmatprep.subr.mxu0 0.0
    %314 = vmatpush1.msra.mxu0 0.0
    %315 = vmatprep.subr.mxu0 0.0
    %316 = vmatpush1.msra.mxu0 0.0
    %317 = vmatprep.subr.mxu0 0.0
    %318 = vmatpush1.msra.mxu0 0.0
    %319 = vmatprep.mubr.f32.mxu0 0.0
    %320 = vmatmul.mubr.f32.gmra.mrb[0].mxu0 %v118
    %v321 = vpop.f32.mrb[0].mxu0
    %v322 = vadd.f32 %v180, %v321
    %v323 = vpop.f32.mrb[0].mxu0
    %324 = vdwg.mxu0
    %325 = vst [vmem:[#allocation3] sm:$0xff] %v251
    %326 = vst [vmem:[#allocation3 + $0x8] sm:$0xff] %v253
    %327 = vst [vmem:[#allocation3 + $0x10] sm:$0xff] %v322
    %v328 = vld [vmem:[%s7] sm:$0x1]
    %v329 = vld [vmem:[#allocation13] sm:$0xff]
    %v330 = vld [vmem:[#allocation13 + $0x8] sm:$0xff]
    %v331 = vld [vmem:[#allocation13 + $0x10] sm:$0xff]
    %v332 = vld [vmem:[#allocation13 + $0x18] sm:$0xff]
    %v333 = vld [vmem:[#allocation13 + $0x20] sm:$0xff]
    %v334 = vld [vmem:[#allocation13 + $0x28] sm:$0xff]
    %v335 = vld [vmem:[#allocation13 + $0x30] sm:$0xff]
    %v336 = vld [vmem:[#allocation13 + $0x38] sm:$0xff]
    %v337 = vld [vmem:[#allocation13 + $0x40] sm:$0xff]
    %v338 = vld [vmem:[#allocation13 + $0x48] sm:$0xff]
    %v339 = vld [vmem:[#allocation13 + $0x50] sm:$0xff]
    %v340 = vld [vmem:[#allocation13 + $0x58] sm:$0xff]
    %v341 = vld [vmem:[#allocation13 + $0x60] sm:$0xff]
    %v342 = vld [vmem:[#allocation13 + $0x68] sm:$0xff]
    %v343 = vld [vmem:[#allocation13 + $0x70] sm:$0xff]
    %v344 = vld [vmem:[#allocation13 + $0x78] sm:$0xff]
    %v345 = vld [vmem:[#allocation13 + $0x80] sm:$0xff]
    %v346 = vld [vmem:[#allocation13 + $0x88] sm:$0xff]
    %v347 = vld [vmem:[#allocation13 + $0x90] sm:$0xff]
    %v348 = vld [vmem:[#allocation13 + $0x98] sm:$0xff]
    %v349 = vld [vmem:[#allocation13 + $0xa0] sm:$0xff]
    %v350 = vld [vmem:[#allocation13 + $0xa8] sm:$0xff]
    %v351 = vld [vmem:[#allocation13 + $0xb0] sm:$0xff]
    %v352 = vld [vmem:[#allocation13 + $0xb8] sm:$0xff]
    %v353 = vld [vmem:[#allocation13 + $0xc0] sm:$0xff]
    %v354 = vld [vmem:[#allocation13 + $0xc8] sm:$0xff]
    %v355 = vld [vmem:[#allocation13 + $0xd0] sm:$0xff]
    %v356 = vld [vmem:[#allocation13 + $0xd8] sm:$0xff]
    %v357 = vld [vmem:[#allocation13 + $0xe0] sm:$0xff]
    %v358 = vld [vmem:[#allocation13 + $0xe8] sm:$0xff]
    %v359 = vld [vmem:[#allocation13 + $0xf0] sm:$0xff]
    %v360 = vld [vmem:[#allocation13 + $0xf8] sm:$0xff]
    %v361 = vld [vmem:[#allocation13 + $0x100] sm:$0xff]
    %v362 = vld [vmem:[#allocation13 + $0x108] sm:$0xff]
    %v363 = vld [vmem:[#allocation13 + $0x110] sm:$0xff]
    %v364 = vld [vmem:[#allocation13 + $0x118] sm:$0xff]
    %v365 = vld [vmem:[#allocation13 + $0x120] sm:$0xff]
    %v366 = vld [vmem:[#allocation13 + $0x128] sm:$0xff]
    %v367 = vld [vmem:[#allocation13 + $0x130] sm:$0xff]
    %v368 = vld [vmem:[#allocation13 + $0x138] sm:$0xff]
    %v369 = vld [vmem:[#allocation13 + $0x140] sm:$0xff]
    %v370 = vld [vmem:[#allocation13 + $0x148] sm:$0xff]
    %v371 = vld [vmem:[#allocation13 + $0x150] sm:$0xff]
    %v372 = vld [vmem:[#allocation13 + $0x158] sm:$0xff]
    %v373 = vld [vmem:[#allocation13 + $0x160] sm:$0xff]
    %v374 = vld [vmem:[#allocation13 + $0x168] sm:$0xff]
    %v375 = vld [vmem:[#allocation13 + $0x170] sm:$0xff]
    %v376 = vld [vmem:[#allocation13 + $0x178] sm:$0xff]
    %v377 = vld [vmem:[%s6] sm:$0x7]
    %v379 = vlaneseq
    %v380 = vshrl.u32 %v379, 7
    %v381 = vsub.s32 0, %v380
    %v382 = vrot.slane %v377, %v381
    %v383 = vlaneseq
    %v384 = vshrl.u32 %v383, 7
    %v385 = vsub.s32 1, %v384
    %v386 = vrot.slane %v377, %v385
    %v387 = vlaneseq
    %v388 = vshrl.u32 %v387, 7
    %v389 = vsub.s32 2, %v388
    %v390 = vrot.slane %v377, %v389
    %394 = vmatprep.subr.mxu0 %v330
    %395 = vmatpush1.msra.mxu0 %v329
    %396 = vmatprep.subr.mxu0 %v333
    %397 = vmatpush1.msra.mxu0 %v332
    %398 = vmatprep.subr.mxu0 %v336
    %399 = vmatpush1.msra.mxu0 %v335
    %400 = vmatprep.subr.mxu0 %v339
    %401 = vmatpush1.msra.mxu0 %v338
    %402 = vmatprep.subr.mxu0 %v342
    %403 = vmatpush1.msra.mxu0 %v341
    %404 = vmatprep.subr.mxu0 %v345
    %405 = vmatpush1.msra.mxu0 %v344
    %406 = vmatprep.subr.mxu0 %v348
    %407 = vmatpush1.msra.mxu0 %v347
    %408 = vmatprep.subr.mxu0 %v351
    %409 = vmatpush1.msra.mxu0 %v350
    %410 = vmatprep.subr.mxu0 %v354
    %411 = vmatpush1.msra.mxu0 %v353
    %412 = vmatprep.subr.mxu0 %v357
    %413 = vmatpush1.msra.mxu0 %v356
    %414 = vmatprep.subr.mxu0 %v360
    %415 = vmatpush1.msra.mxu0 %v359
    %416 = vmatprep.subr.mxu0 %v363
    %417 = vmatpush1.msra.mxu0 %v362
    %418 = vmatprep.subr.mxu0 %v366
    %419 = vmatpush1.msra.mxu0 %v365
    %420 = vmatprep.subr.mxu0 %v369
    %421 = vmatpush1.msra.mxu0 %v368
    %422 = vmatprep.subr.mxu0 %v372
    %423 = vmatpush1.msra.mxu0 %v371
    %424 = vmatprep.subr.mxu0 %v375
    %425 = vmatpush1.msra.mxu0 %v374
    %426 = vmatprep.subr.mxu0 0.0
    %427 = vmatpush1.msra.mxu0 0.0
    %428 = vmatprep.subr.mxu0 0.0
    %429 = vmatpush1.msra.mxu0 0.0
    %430 = vmatprep.subr.mxu0 0.0
    %431 = vmatpush1.msra.mxu0 0.0
    %432 = vmatprep.subr.mxu0 0.0
    %433 = vmatpush1.msra.mxu0 0.0
    %434 = vmatprep.subr.mxu0 0.0
    %435 = vmatpush1.msra.mxu0 0.0
    %436 = vmatprep.subr.mxu0 0.0
    %437 = vmatpush1.msra.mxu0 0.0
    %438 = vmatprep.subr.mxu0 0.0
    %439 = vmatpush1.msra.mxu0 0.0
    %440 = vmatprep.subr.mxu0 0.0
    %441 = vmatpush1.msra.mxu0 0.0
    %442 = vmatprep.subr.mxu0 0.0
    %443 = vmatpush1.msra.mxu0 0.0
    %444 = vmatprep.subr.mxu0 0.0
    %445 = vmatpush1.msra.mxu0 0.0
    %446 = vmatprep.subr.mxu0 0.0
    %447 = vmatpush1.msra.mxu0 0.0
    %448 = vmatprep.subr.mxu0 0.0
    %449 = vmatpush1.msra.mxu0 0.0
    %450 = vmatprep.subr.mxu0 0.0
    %451 = vmatpush1.msra.mxu0 0.0
    %452 = vmatprep.subr.mxu0 0.0
    %453 = vmatpush1.msra.mxu0 0.0
    %454 = vmatprep.subr.mxu0 0.0
    %455 = vmatpush1.msra.mxu0 0.0
    %456 = vmatprep.subr.mxu0 0.0
    %457 = vmatpush1.msra.mxu0 0.0
    %458 = vmatprep.mubr.f32.mxu0 0.0
    %459 = vmatmul.mubr.f32.gmra.mrb[0].mxu0 %v328
    %v460 = vpop.f32.mrb[0].mxu0
    %v461 = vadd.f32 %v382, %v460
    %v462 = vpop.f32.mrb[0].mxu0
    %v463 = vadd.f32 %v386, %v462
    %464 = vdwg.mxu0
    %465 = vmatprep.subr.mxu0 0.0
    %466 = vmatpush1.msra.mxu0 %v331
    %467 = vmatprep.subr.mxu0 0.0
    %468 = vmatpush1.msra.mxu0 %v334
    %469 = vmatprep.subr.mxu0 0.0
    %470 = vmatpush1.msra.mxu0 %v337
    %471 = vmatprep.subr.mxu0 0.0
    %472 = vmatpush1.msra.mxu0 %v340
    %473 = vmatprep.subr.mxu0 0.0
    %474 = vmatpush1.msra.mxu0 %v343
    %475 = vmatprep.subr.mxu0 0.0
    %476 = vmatpush1.msra.mxu0 %v346
    %477 = vmatprep.subr.mxu0 0.0
    %478 = vmatpush1.msra.mxu0 %v349
    %479 = vmatprep.subr.mxu0 0.0
    %480 = vmatpush1.msra.mxu0 %v352
    %481 = vmatprep.subr.mxu0 0.0
    %482 = vmatpush1.msra.mxu0 %v355
    %483 = vmatprep.subr.mxu0 0.0
    %484 = vmatpush1.msra.mxu0 %v358
    %485 = vmatprep.subr.mxu0 0.0
    %486 = vmatpush1.msra.mxu0 %v361
    %487 = vmatprep.subr.mxu0 0.0
    %488 = vmatpush1.msra.mxu0 %v364
    %489 = vmatprep.subr.mxu0 0.0
    %490 = vmatpush1.msra.mxu0 %v367
    %491 = vmatprep.subr.mxu0 0.0
    %492 = vmatpush1.msra.mxu0 %v370
    %493 = vmatprep.subr.mxu0 0.0
    %494 = vmatpush1.msra.mxu0 %v373
    %495 = vmatprep.subr.mxu0 0.0
    %496 = vmatpush1.msra.mxu0 %v376
    %497 = vmatprep.subr.mxu0 0.0
    %498 = vmatpush1.msra.mxu0 0.0
    %499 = vmatprep.subr.mxu0 0.0
    %500 = vmatpush1.msra.mxu0 0.0
    %501 = vmatprep.subr.mxu0 0.0
    %502 = vmatpush1.msra.mxu0 0.0
    %503 = vmatprep.subr.mxu0 0.0
    %504 = vmatpush1.msra.mxu0 0.0
    %505 = vmatprep.subr.mxu0 0.0
    %506 = vmatpush1.msra.mxu0 0.0
    %507 = vmatprep.subr.mxu0 0.0
    %508 = vmatpush1.msra.mxu0 0.0
    %509 = vmatprep.subr.mxu0 0.0
    %510 = vmatpush1.msra.mxu0 0.0
    %511 = vmatprep.subr.mxu0 0.0
    %512 = vmatpush1.msra.mxu0 0.0
    %513 = vmatprep.subr.mxu0 0.0
    %514 = vmatpush1.msra.mxu0 0.0
    %515 = vmatprep.subr.mxu0 0.0
    %516 = vmatpush1.msra.mxu0 0.0
    %517 = vmatprep.subr.mxu0 0.0
    %518 = vmatpush1.msra.mxu0 0.0
    %519 = vmatprep.subr.mxu0 0.0
    %520 = vmatpush1.msra.mxu0 0.0
    %521 = vmatprep.subr.mxu0 0.0
    %522 = vmatpush1.msra.mxu0 0.0
    %523 = vmatprep.subr.mxu0 0.0
    %524 = vmatpush1.msra.mxu0 0.0
    %525 = vmatprep.subr.mxu0 0.0
    %526 = vmatpush1.msra.mxu0 0.0
    %527 = vmatprep.subr.mxu0 0.0
    %528 = vmatpush1.msra.mxu0 0.0
    %529 = vmatprep.mubr.f32.mxu0 0.0
    %530 = vmatmul.mubr.f32.gmra.mrb[0].mxu0 %v328
    %v531 = vpop.f32.mrb[0].mxu0
    %v532 = vadd.f32 %v390, %v531
    %v533 = vpop.f32.mrb[0].mxu0
    %534 = vdwg.mxu0
    %v535 = vld [vmem:[#allocation3] ss:$8 sm:$0x7]
    %v536 = vadd.f32 %v535, %v461
    %v537 = vxor.u32 %v536, 2147483648
    %v538 = vmul.f32 %v537, 1.442695
    %v539 = vpow.pop %v538
    %v540 = vadd.f32 %v539, 1.0
    %v541 = vrcp.pop %v540
    %v542 = vmul.f32 1.0, %v541
    %v544 = vrot.slane %v535, 1
    %v546 = vadd.f32 %v544, %v463
    %v547 = vxor.u32 %v546, 2147483648
    %v548 = vmul.f32 %v547, 1.442695
    %v549 = vpow.pop %v548
    %v550 = vadd.f32 %v549, 1.0
    %v551 = vrcp.pop %v550
    %v552 = vmul.f32 1.0, %v551
    %v553 = vmul.f32 %v542, %v532
    %v554 = vrot.slane %v535, 2
    %v556 = vadd.f32 %v554, %v553
    %v557 = vtanh.pop %v556
    %v558 = vsub.f32 1.0, %v552
    %v559 = vmul.f32 %v558, %v557
    %v560 = vmul.f32 %v552, %v328
    %v561 = vadd.f32 %v559, %v560
    %562 = vst [vmem:[#allocation4] sm:$0x1] %v561
    %563 = vst [vmem:[#allocation17] sm:$0x1] %v561
    %v564 = vld [vmem:[#allocation4] sm:$0xff]
    %v565 = vld [vmem:[#allocation15] sm:$0xff]
    %v566 = vld [vmem:[#allocation15 + $0x8] sm:$0xff]
    %v567 = vld [vmem:[#allocation15 + $0x10] sm:$0xff]
    %v568 = vld [vmem:[#allocation15 + $0x18] sm:$0xff]
    %v569 = vld [vmem:[#allocation15 + $0x20] sm:$0xff]
    %v570 = vld [vmem:[#allocation15 + $0x28] sm:$0xff]
    %v571 = vld [vmem:[#allocation15 + $0x30] sm:$0xff]
    %v572 = vld [vmem:[#allocation15 + $0x38] sm:$0xff]
    %v573 = vld [vmem:[#allocation15 + $0x40] sm:$0xff]
    %v574 = vld [vmem:[#allocation15 + $0x48] sm:$0xff]
    %v575 = vld [vmem:[#allocation15 + $0x50] sm:$0xff]
    %v576 = vld [vmem:[#allocation15 + $0x58] sm:$0xff]
    %v577 = vld [vmem:[#allocation15 + $0x60] sm:$0xff]
    %v578 = vld [vmem:[#allocation15 + $0x68] sm:$0xff]
    %v579 = vld [vmem:[#allocation15 + $0x70] sm:$0xff]
    %v580 = vld [vmem:[#allocation15 + $0x78] sm:$0xff]
    %v581 = vld [vmem:[%s9] sm:$0x1]
    %v583 = vlaneseq
    %v584 = vshrl.u32 %v583, 7
    %v585 = vsub.s32 0, %v584
    %v586 = vrot.slane %v581, %v585
    %588 = vmatprep.subr.mxu0 0.0
    %589 = vmatpush1.msra.mxu0 %v565
    %590 = vmatprep.subr.mxu0 0.0
    %591 = vmatpush1.msra.mxu0 %v566
    %592 = vmatprep.subr.mxu0 0.0
    %593 = vmatpush1.msra.mxu0 %v567
    %594 = vmatprep.subr.mxu0 0.0
    %595 = vmatpush1.msra.mxu0 %v568
    %596 = vmatprep.subr.mxu0 0.0
    %597 = vmatpush1.msra.mxu0 %v569
    %598 = vmatprep.subr.mxu0 0.0
    %599 = vmatpush1.msra.mxu0 %v570
    %600 = vmatprep.subr.mxu0 0.0
    %601 = vmatpush1.msra.mxu0 %v571
    %602 = vmatprep.subr.mxu0 0.0
    %603 = vmatpush1.msra.mxu0 %v572
    %604 = vmatprep.subr.mxu0 0.0
    %605 = vmatpush1.msra.mxu0 %v573
    %606 = vmatprep.subr.mxu0 0.0
    %607 = vmatpush1.msra.mxu0 %v574
    %608 = vmatprep.subr.mxu0 0.0
    %609 = vmatpush1.msra.mxu0 %v575
    %610 = vmatprep.subr.mxu0 0.0
    %611 = vmatpush1.msra.mxu0 %v576
    %612 = vmatprep.subr.mxu0 0.0
    %613 = vmatpush1.msra.mxu0 %v577
    %614 = vmatprep.subr.mxu0 0.0
    %615 = vmatpush1.msra.mxu0 %v578
    %616 = vmatprep.subr.mxu0 0.0
    %617 = vmatpush1.msra.mxu0 %v579
    %618 = vmatprep.subr.mxu0 0.0
    %619 = vmatpush1.msra.mxu0 %v580
    %620 = vmatprep.subr.mxu0 0.0
    %621 = vmatpush1.msra.mxu0 0.0
    %622 = vmatprep.subr.mxu0 0.0
    %623 = vmatpush1.msra.mxu0 0.0
    %624 = vmatprep.subr.mxu0 0.0
    %625 = vmatpush1.msra.mxu0 0.0
    %626 = vmatprep.subr.mxu0 0.0
    %627 = vmatpush1.msra.mxu0 0.0
    %628 = vmatprep.subr.mxu0 0.0
    %629 = vmatpush1.msra.mxu0 0.0
    %630 = vmatprep.subr.mxu0 0.0
    %631 = vmatpush1.msra.mxu0 0.0
    %632 = vmatprep.subr.mxu0 0.0
    %633 = vmatpush1.msra.mxu0 0.0
    %634 = vmatprep.subr.mxu0 0.0
    %635 = vmatpush1.msra.mxu0 0.0
    %636 = vmatprep.subr.mxu0 0.0
    %637 = vmatpush1.msra.mxu0 0.0
    %638 = vmatprep.subr.mxu0 0.0
    %639 = vmatpush1.msra.mxu0 0.0
    %640 = vmatprep.subr.mxu0 0.0
    %641 = vmatpush1.msra.mxu0 0.0
    %642 = vmatprep.subr.mxu0 0.0
    %643 = vmatpush1.msra.mxu0 0.0
    %644 = vmatprep.subr.mxu0 0.0
    %645 = vmatpush1.msra.mxu0 0.0
    %646 = vmatprep.subr.mxu0 0.0
    %647 = vmatpush1.msra.mxu0 0.0
    %648 = vmatprep.subr.mxu0 0.0
    %649 = vmatpush1.msra.mxu0 0.0
    %650 = vmatprep.subr.mxu0 0.0
    %651 = vmatpush1.msra.mxu0 0.0
    %652 = vmatprep.mubr.f32.mxu0 0.0
    %653 = vmatmul.mubr.f32.gmra.mrb[0].mxu0 %v564
    %v654 = vpop.f32.mrb[0].mxu0
    %v655 = vadd.f32 %v586, %v654
    %v656 = vpop.f32.mrb[0].mxu0
    %657 = vdwg.mxu0
    %658 = vmax.xlane.f32.xlu0 %v655
    %v659 = vpop.xlane.xlu0 %658
    %v660 = vsub.f32 %v655, %v659
    %v661 = vmul.f32 %v660, 1.442695
    %v662 = vpow.pop %v661
    %663 = vadd.xlane.f32.xlu0 %v662
    %v664 = vpop.xlane.xlu0 %663
    %v665 = vlog2.pop %v664
    %v666 = vmul.f32 %v665, 0.6931472
    %v667 = vsub.f32 %v660, %v666
    %668 = vst [vmem:[#allocation16] sm:$0xff] %v667
    // Predicated region
    $region58: #{tpu_custom_call.1} parent=1 // pred_check
      _
    $region59: #{tpu_custom_call.1} parent=1 // pred_check_branch
      %670 = sbr.rel (0) target = $region61
    $region60: #{tpu_custom_call.1} parent=1 // pred_region
      %s672 = ssub.s32 128, 128
      %673 = vsyncadd [#allocation9], %s672
      %s675 = sshll.u32 [#allocation16], 4
      %s676 = int_to_ptr.vmem [resolvable:$true] %s675
      %678 = dma.vmem_to_hbm [thread:$0]  %s676, 128, %s10, [#allocation9]
    $region61: #{tpu_custom_call.1} parent=1 // pred_fallthru
      _
    // Predicated region
    $region62: #{tpu_custom_call.1} parent=1 // pred_check
      _
    $region63: #{tpu_custom_call.1} parent=1 // pred_check_branch
      %680 = sbr.rel (0) target = $region65
    $region64: #{tpu_custom_call.1} parent=1 // pred_region
      %s682 = ssub.s32 16, 16
      %683 = vsyncadd [#allocation18], %s682
      %s685 = sshll.u32 [#allocation17], 4
      %s686 = int_to_ptr.vmem [resolvable:$true] %s685
      %688 = dma.vmem_to_hbm [thread:$0]  %s686, 16, %s11, [#allocation18]
    $region65: #{tpu_custom_call.1} parent=1 // pred_fallthru
      _
    // Predicated region
    $region66: #{tpu_custom_call.1} parent=1 // pred_check
      _
    $region67: #{tpu_custom_call.1} parent=1 // pred_check_branch
      %690 = sbr.rel (0) target = $region69
    $region68: #{tpu_custom_call.1} parent=1 // pred_region
      %691 = dma.done [#allocation9], 128
    $region69: #{tpu_custom_call.1} parent=1 // pred_fallthru
      _
    // Predicated region
    $region70: #{tpu_custom_call.1} parent=1 // pred_check
      _
    $region71: #{tpu_custom_call.1} parent=1 // pred_check_branch
      %693 = sbr.rel (0) target = $region73
    $region72: #{tpu_custom_call.1} parent=1 // pred_region
      %694 = dma.done [#allocation18], 16
    $region73: #{tpu_custom_call.1} parent=1 // pred_fallthru
      _
    %695 = vsyncpa [#allocation8], 1
    %696 = vsyncpa [#allocation11], 1
    %697 = vsyncpa [#allocation14], 1
    %698 = vsyncpa [#allocation9], 1
    %699 = vsyncpa [#allocation18], 1

</llo_original>
